<compile_context>
chip_gen: v7x
topology: tpu7x:2x2x1
jax: 0.10.0
libtpu: 0.0.40
codegen_flags: <defaults>
</compile_context>

<pallas_src>
import math

import jax
import jax.numpy as jnp
from jax.experimental import pallas as pl
from jax.experimental.pallas import tpu as pltpu


LANE = 128          # pad every feature dim to a multiple of the vreg lane width
ROW_TILE = 16       # batch rows padded to the bf16 sublane tile (also /8 for f32)
NEG_FILL = -1e30    # poison value for padded class columns (exp -> 0)


def _round_up(n, m):
    return ((n + m - 1) // m) * m


def _cdiv(a, b):
    return -(-a // b)


def make_mlp_kernel(num_linear):
    """Build a Pallas kernel for an MLP with `num_linear` Linear layers."""

    def kernel(*refs):
        # refs = (x_ref, w0_ref, b0_ref, w1_ref, b1_ref, ..., out_ref)
        x_ref = refs[0]
        out_ref = refs[-1]
        params = refs[1:-1]

        h = x_ref[...]                                   # bf16 [tm, d0_pad]
        for i in range(num_linear):
            w = params[2 * i][...]                       # bf16 [din_pad, dout_pad]
            b = params[2 * i + 1][...]                   # f32  [1, dout_pad]
            # bf16 operands on the MXU, f32 accumulation; bias add in f32.
            z = jnp.dot(h, w, preferred_element_type=jnp.float32) + b
            if i < num_linear - 1:
                # ReLU in f32 (v5e-safe), re-pack to bf16 for the next MXU op.
                h = jnp.maximum(z, 0.0).astype(jnp.bfloat16)
                # TODO(synk): nn.Dropout(p=0.2) is identity at inference;
                # training-mode stochastic masking is intentionally omitted.
            else:
                h = z                                    # final logits, f32

        # Padded class columns carry a -1e30 bias (weights there are zero), so
        # a plain softmax over the lane-dense padded row is already correct.
        m = jnp.max(h, axis=1, keepdims=True)
        e = jnp.exp(h - m)
        s = jnp.sum(e, axis=1, keepdims=True)
        out_ref[...] = (e * pl.reciprocal(s, approx=True)).astype(out_ref.dtype)

    return kernel


class MLPPallas:
    """MLP forward pass with parameters padded/cast once and cached."""

    def __init__(self, weights, biases, *, tm_max=512):
        self.num_linear = len(weights)
        dims = [weights[0].shape[0]] + [w.shape[1] for w in weights]
        self.dims = dims
        self.dims_pad = [_round_up(d, LANE) for d in dims]
        self.num_classes = dims[-1]
        self.tm_max = max(ROW_TILE, _round_up(tm_max, ROW_TILE))

        # One-time padding + casting of all parameters (cached on device).
        padded = []
        param_bytes = 0
        for i, (w, b) in enumerate(zip(weights, biases)):
            din, dout = w.shape
            dpi, dpo = self.dims_pad[i], self.dims_pad[i + 1]
            w_p = jnp.zeros((dpi, dpo), jnp.bfloat16)
            w_p = w_p.at[:din, :dout].set(
                jnp.asarray(w, jnp.float32).astype(jnp.bfloat16))
            is_last = (i == self.num_linear - 1)
            fill = NEG_FILL if is_last else 0.0   # poison padded class columns
            b_p = jnp.full((1, dpo), fill, jnp.float32)
            b_p = b_p.at[:, :dout].set(
                jnp.asarray(b, jnp.float32).reshape(1, dout))
            padded += [w_p, b_p]
            param_bytes += w_p.size * 2 + b_p.size * 4
        self.padded_params = padded
        self.param_bytes = param_bytes

        self.kernel = make_mlp_kernel(self.num_linear)
        self._fwd = jax.jit(self._forward_impl)

    def _tiling(self, batch):
        b_rows = _round_up(batch, ROW_TILE)
        # >=2 batch tiles when there's enough work (both TensorCores on v7x),
        # capped at tm_max rows per tile; never pad batch up to a tm multiple.
        n_tiles = max(_cdiv(b_rows, self.tm_max),
                      2 if b_rows >= 2 * ROW_TILE else 1)
        tm = _round_up(_cdiv(b_rows, n_tiles), ROW_TILE)
        n_tiles = _cdiv(b_rows, tm)
        return n_tiles * tm, tm, n_tiles

    def _forward_impl(self, x):
        batch, in_dim = x.shape
        assert in_dim == self.dims[0], "input feature dim mismatch"

        b_pad, tm, n_tiles = self._tiling(batch)
        d0_pad = self.dims_pad[0]
        dout_pad = self.dims_pad[-1]

        # Zero-padded bf16 input slab (half the DMA bytes of f32).
        x_p = jnp.zeros((b_pad, d0_pad), jnp.bfloat16)
        x_p = x_p.at[:batch, :in_dim].set(x.astype(jnp.bfloat16))

        args = [x_p] + self.padded_params

        in_specs = [pl.BlockSpec((tm, d0_pad), lambda i: (i, 0))]
        for a in self.padded_params:
            # Grid-invariant weights/biases: fetched once, single-buffered.
            in_specs.append(
                pl.BlockSpec(a.shape, lambda i: (0, 0),
                             pipeline_mode=pl.Buffered(1)))

        # VMEM budget: double-buffered x/out tiles + resident params +
        # activation working set, with 2x headroom (clamped to sane range).
        vmem_est = (2 * tm * (d0_pad * 2 + dout_pad * 4)
                    + self.param_bytes
                    + 4 * tm * max(self.dims_pad) * 4
                    + (1 << 20))
        vmem_limit = int(min(96 << 20, max(32 << 20, 2 * vmem_est)))

        out_p = pl.pallas_call(
            self.kernel,
            out_shape=jax.ShapeDtypeStruct((b_pad, dout_pad), jnp.float32),
            grid=(n_tiles,),
            in_specs=in_specs,
            out_specs=pl.BlockSpec((tm, dout_pad), lambda i: (i, 0)),
            compiler_params=pltpu.CompilerParams(
                dimension_semantics=("parallel",),
                vmem_limit_bytes=vmem_limit),
        )(*args)

        return out_p[:batch, :self.num_classes]

    def __call__(self, x):
        return self._fwd(x)


def init_params(units_per_layer, key):
    """Deterministic init mimicking PyTorch nn.Linear default U(-1/sqrt(in), 1/sqrt(in))."""
    weights, biases = [], []
    for i in range(len(units_per_layer) - 1):
        fan_in = units_per_layer[i]
        fan_out = units_per_layer[i + 1]
        bound = 1.0 / math.sqrt(fan_in)
        key, kw, kb = jax.random.split(key, 3)
        # Stored as (in, out): transpose of the PyTorch (out, in) weight.
        w = jax.random.uniform(kw, (fan_in, fan_out), jnp.float32, -bound, bound)
        b = jax.random.uniform(kb, (1, fan_out), jnp.float32, -bound, bound)
        weights.append(w)
        biases.append(b)
    return weights, biases


def reference_forward(x, weights, biases):
    """Plain-JAX f32 reference for correctness checking."""
    h = x
    n = len(weights)
    for i, (w, b) in enumerate(zip(weights, biases)):
        h = h @ w + b.reshape(1, -1)
        if i < n - 1:
            h = jnp.maximum(h, 0.0)
    return jax.nn.softmax(h, axis=1)


if __name__ == "__main__":
    # 16 input features -> 32 hidden -> 8 classes (len(units_per_layer) >= 2).
    units_per_layer = [16, 32, 8]

    key = jax.random.PRNGKey(0)
    key, kparams = jax.random.split(key)
    weights, biases = init_params(units_per_layer, kparams)

    # Parameters padded / cast to bf16 exactly once here.
    model = MLPPallas(weights, biases, tm_max=512)

    # Case 1: small batch -> single batch tile.
    key, kx = jax.random.split(key)
    x_small = jax.random.normal(kx, (8, units_per_layer[0]), jnp.float32)
    out_small = jax.block_until_ready(model(x_small))
    ref_small = reference_forward(x_small, weights, biases)
    assert out_small.shape == (8, units_per_layer[-1])
    assert jnp.allclose(out_small, ref_small, atol=1e-2, rtol=1e-2), \
        "mismatch vs reference (single-tile path)"
    assert jnp.allclose(jnp.sum(out_small, axis=1), jnp.ones((8,)), atol=5e-3)

    # Case 2: larger batch -> >=2 'parallel' batch tiles (both TCs on v7x).
    key, kx2 = jax.random.split(key)
    x_big = jax.random.normal(kx2, (20, units_per_layer[0]), jnp.float32)
    out_big = jax.block_until_ready(model(x_big))
    ref_big = reference_forward(x_big, weights, biases)
    assert out_big.shape == (20, units_per_layer[-1])
    assert jnp.allclose(out_big, ref_big, atol=1e-2, rtol=1e-2), \
        "mismatch vs reference (multi-tile path)"

    # Repeat call at a cached shape: hot path is the jitted pallas_call only.
    out_small2 = jax.block_until_ready(model(x_small))
    assert jnp.allclose(out_small2, out_small)

    print("KERNEL_OK")
</pallas_src>

<mosaic_0001>
module attributes {stable_mosaic.version = 11 : i64} {
  func.func @kernel(%arg0: i32, %arg1: memref<16x128xbf16, #tpu.memory_space<vmem>>, %arg2: memref<128x128xbf16, #tpu.memory_space<vmem>>, %arg3: memref<1x128xf32, #tpu.memory_space<vmem>>, %arg4: memref<128x128xbf16, #tpu.memory_space<vmem>>, %arg5: memref<1x128xf32, #tpu.memory_space<vmem>>, %arg6: memref<16x128xf32, #tpu.memory_space<vmem>>) attributes {dimension_semantics = [#tpu.dimension_semantics<parallel>], iteration_bounds = array<i64: 1>, scalar_prefetch = 0 : i64, scratch_operands = 0 : i64, tpu.core_type = #tpu.core_type<tc>, window_params = [{transform_indices = @transform_0, window_bounds = array<i64: 16, 128>}, {pipeline_mode = #tpu.pipeline_mode<synchronous>, transform_indices = @transform_1, window_bounds = array<i64: 128, 128>}, {pipeline_mode = #tpu.pipeline_mode<synchronous>, transform_indices = @transform_2, window_bounds = array<i64: 1, 128>}, {pipeline_mode = #tpu.pipeline_mode<synchronous>, transform_indices = @transform_3, window_bounds = array<i64: 128, 128>}, {pipeline_mode = #tpu.pipeline_mode<synchronous>, transform_indices = @transform_4, window_bounds = array<i64: 1, 128>}, {transform_indices = @transform_5, window_bounds = array<i64: 16, 128>}]} {
    %c0 = arith.constant 0 : index
    %c0_0 = arith.constant 0 : index
    %0 = vector.load %arg1[%c0, %c0_0] : memref<16x128xbf16, #tpu.memory_space<vmem>>, vector<16x128xbf16>
    %c0_1 = arith.constant 0 : index
    %c0_2 = arith.constant 0 : index
    %1 = vector.load %arg2[%c0_1, %c0_2] : memref<128x128xbf16, #tpu.memory_space<vmem>>, vector<128x128xbf16>
    %c0_3 = arith.constant 0 : index
    %c0_4 = arith.constant 0 : index
    %2 = vector.load %arg3[%c0_3, %c0_4] : memref<1x128xf32, #tpu.memory_space<vmem>>, vector<1x128xf32>
    %cst = arith.constant dense<0.000000e+00> : vector<16x128xf32>
    %3 = tpu.matmul %0, %1, %cst {dimension_numbers = #tpu.dot_dimension_numbers<[1], [0], [0], [1], [0, 0, 1, 1], [], []>} : vector<16x128xbf16>, vector<128x128xbf16>, vector<16x128xf32> -> vector<16x128xf32>
    %4 = vector.broadcast %2 : vector<1x128xf32> to vector<16x128xf32>
    %5 = arith.addf %3, %4 : vector<16x128xf32>
    %cst_5 = arith.constant 0.000000e+00 : f32
    %6 = vector.broadcast %cst_5 : f32 to vector<16x128xf32>
    %7 = arith.maximumf %5, %6 : vector<16x128xf32>
    %8 = arith.truncf %7 : vector<16x128xf32> to vector<16x128xbf16>
    %c0_6 = arith.constant 0 : index
    %c0_7 = arith.constant 0 : index
    %9 = vector.load %arg4[%c0_6, %c0_7] : memref<128x128xbf16, #tpu.memory_space<vmem>>, vector<128x128xbf16>
    %c0_8 = arith.constant 0 : index
    %c0_9 = arith.constant 0 : index
    %10 = vector.load %arg5[%c0_8, %c0_9] : memref<1x128xf32, #tpu.memory_space<vmem>>, vector<1x128xf32>
    %cst_10 = arith.constant dense<0.000000e+00> : vector<16x128xf32>
    %11 = tpu.matmul %8, %9, %cst_10 {dimension_numbers = #tpu.dot_dimension_numbers<[1], [0], [0], [1], [0, 0, 1, 1], [], []>} : vector<16x128xbf16>, vector<128x128xbf16>, vector<16x128xf32> -> vector<16x128xf32>
    %12 = vector.broadcast %10 : vector<1x128xf32> to vector<16x128xf32>
    %13 = arith.addf %11, %12 : vector<16x128xf32>
    %cst_11 = arith.constant dense<0xFF800000> : vector<16xf32>
    %14 = vector.multi_reduction <maximumf>, %13, %cst_11 [1] : vector<16x128xf32> to vector<16xf32>
    %15 = vector.shape_cast %14 : vector<16xf32> to vector<16x1xf32>
    %16 = vector.broadcast %15 : vector<16x1xf32> to vector<16x128xf32>
    %17 = arith.subf %13, %16 : vector<16x128xf32>
    %18 = math.exp %17 : vector<16x128xf32>
    %cst_12 = arith.constant dense<0.000000e+00> : vector<16xf32>
    %19 = vector.multi_reduction <add>, %18, %cst_12 [1] : vector<16x128xf32> to vector<16xf32>
    %20 = vector.shape_cast %19 : vector<16xf32> to vector<16x1xf32>
    %21 = tpu.reciprocal %20 {approx = true} : vector<16x1xf32> -> vector<16x1xf32>
    %22 = vector.broadcast %21 : vector<16x1xf32> to vector<16x128xf32>
    %23 = arith.mulf %18, %22 : vector<16x128xf32>
    %c0_13 = arith.constant 0 : index
    %c0_14 = arith.constant 0 : index
    %24 = vector.load %arg6[%c0_13, %c0_14] : memref<16x128xf32, #tpu.memory_space<vmem>>, vector<16x128xf32>
    tpu.vector_store %arg6[%c0_13, %c0_14], %23 {strides = array<i32>} : memref<16x128xf32, #tpu.memory_space<vmem>>, vector<16x128xf32>,
    return
  }
  func.func @transform_0(%arg0: i32) -> (i32, i32) {
    %c0_i32 = arith.constant 0 : i32
    %c0_i32_0 = arith.constant 0 : i32
    return %arg0, %c0_i32 : i32, i32
  }
  func.func @transform_1(%arg0: i32) -> (i32, i32) {
    %c0_i32 = arith.constant 0 : i32
    %c0_i32_0 = arith.constant 0 : i32
    %c0_i32_1 = arith.constant 0 : i32
    return %c0_i32, %c0_i32_0 : i32, i32
  }
  func.func @transform_2(%arg0: i32) -> (i32, i32) {
    %c0_i32 = arith.constant 0 : i32
    %c0_i32_0 = arith.constant 0 : i32
    %c0_i32_1 = arith.constant 0 : i32
    return %c0_i32, %c0_i32_0 : i32, i32
  }
  func.func @transform_3(%arg0: i32) -> (i32, i32) {
    %c0_i32 = arith.constant 0 : i32
    %c0_i32_0 = arith.constant 0 : i32
    %c0_i32_1 = arith.constant 0 : i32
    return %c0_i32, %c0_i32_0 : i32, i32
  }
  func.func @transform_4(%arg0: i32) -> (i32, i32) {
    %c0_i32 = arith.constant 0 : i32
    %c0_i32_0 = arith.constant 0 : i32
    %c0_i32_1 = arith.constant 0 : i32
    return %c0_i32, %c0_i32_0 : i32, i32
  }
  func.func @transform_5(%arg0: i32) -> (i32, i32) {
    %c0_i32 = arith.constant 0 : i32
    %c0_i32_0 = arith.constant 0 : i32
    return %arg0, %c0_i32 : i32, i32
  }
}

</mosaic_0001>

<llo_original>
// kernel: _forward_impl.1
$region0: #{_forward_impl.1}
  #allocation0 [shape = 'u32[]', space=smem, size = 0x4, offset = 0x4, fixed_abs, tag = 'smem constant byte address 0x4 - core index']
  #allocation1 [shape = 'u32[144,128]{1,0:T(1,128)}', space=vmem, size = 0x12000, scoped, tag = 'internal scratch']
  %s0 = inlined_call_operand.vmem [shape: bf16[16,128], index: 0, kind: input, shape index: {}]
  %s1 = inlined_call_operand.hbm [shape: bf16[128,128], index: 1, kind: input, shape index: {}]
  %s2 = inlined_call_operand.vmem [shape: f32[1,128], index: 2, kind: input, shape index: {}]
  %s3 = inlined_call_operand.hbm [shape: bf16[128,128], index: 3, kind: input, shape index: {}]
  %s4 = inlined_call_operand.vmem [shape: f32[1,128], index: 4, kind: input, shape index: {}]
  %s5 = inlined_call_operand.vmem [shape: f32[16,128], index: 5, kind: output, shape index: {}]
  %s6 = sld [smem:[#allocation0]]
  $region38: #{_forward_impl.1} parent=0
    _
  %s8 = ssub.s32 1, %s6
  %s9 = scalar_select 0, %s8, %s6
  $region1: #{_forward_impl.1} parent=0
    #allocation2 [shape = 'u8[32768]{0}', space=vmem, size = 0x8000, scoped, tag = 'input window, operand 1, single buffered']
    #allocation3 [shape = 's32[1]{0}', space=sflag, size = 0x4, scoped, tag = 'scoped memory for _forward_impl.1']
    #allocation4 [shape = 'u8[32768]{0}', space=vmem, size = 0x8000, scoped, tag = 'input window, operand 3, single buffered']
    #allocation5 [shape = 's32[1]{0}', space=sflag, size = 0x4, scoped, tag = 'scoped memory for _forward_impl.1']
    %10 = vsyncpa [#allocation3], 0
    %11 = vsyncpa [#allocation5], 0
    // Predicated region
    $region2: #{_forward_impl.1} parent=1 // pred_check
      _
    $region3: #{_forward_impl.1} parent=1 // pred_check_branch
      %13 = sbr.rel (0) target = $region5
    $region4: #{_forward_impl.1} parent=1 // pred_region
      _
    $region5: #{_forward_impl.1} parent=1 // pred_fallthru
      _
    // Predicated region
    $region6: #{_forward_impl.1} parent=1 // pred_check
      _
    $region7: #{_forward_impl.1} parent=1 // pred_check_branch
      %15 = sbr.rel (0) target = $region9
    $region8: #{_forward_impl.1} parent=1 // pred_region
      %s17 = ssub.s32 1024, 1024
      %18 = vsyncadd [#allocation3], %s17
      %s19 = sshll.u32 [#allocation2], 4
      %s20 = int_to_ptr.vmem [resolvable:$true] %s19
      %25 = dma.hbm_to_vmem [thread:$0]  %s1, 1024, %s20, [#allocation3], 64, 64, 4
    $region9: #{_forward_impl.1} parent=1 // pred_fallthru
      _
    // Predicated region
    $region10: #{_forward_impl.1} parent=1 // pred_check
      _
    $region11: #{_forward_impl.1} parent=1 // pred_check_branch
      %27 = sbr.rel (0) target = $region13
    $region12: #{_forward_impl.1} parent=1 // pred_region
      _
    $region13: #{_forward_impl.1} parent=1 // pred_fallthru
      _
    // Predicated region
    $region14: #{_forward_impl.1} parent=1 // pred_check
      _
    $region15: #{_forward_impl.1} parent=1 // pred_check_branch
      %29 = sbr.rel (0) target = $region17
    $region16: #{_forward_impl.1} parent=1 // pred_region
      %s31 = ssub.s32 1024, 1024
      %32 = vsyncadd [#allocation5], %s31
      %s33 = sshll.u32 [#allocation4], 4
      %s34 = int_to_ptr.vmem [resolvable:$true] %s33
      %39 = dma.hbm_to_vmem [thread:$0]  %s3, 1024, %s34, [#allocation5], 64, 64, 4
    $region17: #{_forward_impl.1} parent=1 // pred_fallthru
      _
    // Predicated region
    $region18: #{_forward_impl.1} parent=1 // pred_check
      _
    $region19: #{_forward_impl.1} parent=1 // pred_check_branch
      %41 = sbr.rel (0) target = $region21
    $region20: #{_forward_impl.1} parent=1 // pred_region
      _
    $region21: #{_forward_impl.1} parent=1 // pred_fallthru
      _
    // Predicated region
    $region22: #{_forward_impl.1} parent=1 // pred_check
      _
    $region23: #{_forward_impl.1} parent=1 // pred_check_branch
      %43 = sbr.rel (0) target = $region25
    $region24: #{_forward_impl.1} parent=1 // pred_region
      %44 = dma.done [#allocation3], 1024
    $region25: #{_forward_impl.1} parent=1 // pred_fallthru
      _
    // Predicated region
    $region26: #{_forward_impl.1} parent=1 // pred_check
      _
    $region27: #{_forward_impl.1} parent=1 // pred_check_branch
      %46 = sbr.rel (0) target = $region29
    $region28: #{_forward_impl.1} parent=1 // pred_region
      %47 = dma.done [#allocation5], 1024
    $region29: #{_forward_impl.1} parent=1 // pred_fallthru
      _
    %v49 = vld [vmem:[%s0] sm:$0xf]
    %v50 = vld [vmem:[%s0 + $0x4] sm:$0xf]
    %v51 = vld [vmem:[#allocation2] sm:$0xf]
    %v52 = vld [vmem:[#allocation2 + $0x4] sm:$0xf]
    %v53 = vld [vmem:[#allocation2 + $0x8] sm:$0xf]
    %v54 = vld [vmem:[#allocation2 + $0xc] sm:$0xf]
    %v55 = vld [vmem:[#allocation2 + $0x10] sm:$0xf]
    %v56 = vld [vmem:[#allocation2 + $0x14] sm:$0xf]
    %v57 = vld [vmem:[#allocation2 + $0x18] sm:$0xf]
    %v58 = vld [vmem:[#allocation2 + $0x1c] sm:$0xf]
    %v59 = vld [vmem:[#allocation2 + $0x20] sm:$0xf]
    %v60 = vld [vmem:[#allocation2 + $0x24] sm:$0xf]
    %v61 = vld [vmem:[#allocation2 + $0x28] sm:$0xf]
    %v62 = vld [vmem:[#allocation2 + $0x2c] sm:$0xf]
    %v63 = vld [vmem:[#allocation2 + $0x30] sm:$0xf]
    %v64 = vld [vmem:[#allocation2 + $0x34] sm:$0xf]
    %v65 = vld [vmem:[#allocation2 + $0x38] sm:$0xf]
    %v66 = vld [vmem:[#allocation2 + $0x3c] sm:$0xf]
    %v67 = vld [vmem:[%s2] sm:$0x1]
    %v69 = vlaneseq
    %v70 = vshrl.u32 %v69, 7
    %v71 = vsub.s32 0, %v70
    %v72 = vrot.slane %v67, %v71
    %v76 = vunpack.c.l.b16 %v49
    %v77 = vunpack.c.l.b16 %v50
    %v78 = vpack.c.b16 %v77, %v76
    %v96 = vunpack.c.l.b16 %v51
    %v97 = vunpack.c.l.b16 %v52
    %v98 = vunpack.c.l.b16 %v53
    %v99 = vunpack.c.l.b16 %v54
    %v100 = vunpack.c.l.b16 %v55
    %v101 = vunpack.c.l.b16 %v56
    %v102 = vunpack.c.l.b16 %v57
    %v103 = vunpack.c.l.b16 %v58
    %v104 = vunpack.c.l.b16 %v59
    %v105 = vunpack.c.l.b16 %v60
    %v106 = vunpack.c.l.b16 %v61
    %v107 = vunpack.c.l.b16 %v62
    %v108 = vunpack.c.l.b16 %v63
    %v109 = vunpack.c.l.b16 %v64
    %v110 = vunpack.c.l.b16 %v65
    %v111 = vunpack.c.l.b16 %v66
    %v112 = vpack.c.b16 %v97, %v96
    %v113 = vpack.c.b16 %v99, %v98
    %v114 = vpack.c.b16 %v101, %v100
    %v115 = vpack.c.b16 %v103, %v102
    %v116 = vpack.c.b16 %v105, %v104
    %v117 = vpack.c.b16 %v107, %v106
    %v118 = vpack.c.b16 %v109, %v108
    %v119 = vpack.c.b16 %v111, %v110
    %128 = vmatprep.subr.bf16.mxu0 0
    %129 = vmatpush1.bf16.msra.mxu0 %v112
    %130 = vmatprep.subr.bf16.mxu0 0
    %131 = vmatpush1.bf16.msra.mxu0 %v113
    %132 = vmatprep.subr.bf16.mxu0 0
    %133 = vmatpush1.bf16.msra.mxu0 %v114
    %134 = vmatprep.subr.bf16.mxu0 0
    %135 = vmatpush1.bf16.msra.mxu0 %v115
    %136 = vmatprep.subr.bf16.mxu0 0
    %137 = vmatpush1.bf16.msra.mxu0 %v116
    %138 = vmatprep.subr.bf16.mxu0 0
    %139 = vmatpush1.bf16.msra.mxu0 %v117
    %140 = vmatprep.subr.bf16.mxu0 0
    %141 = vmatpush1.bf16.msra.mxu0 %v118
    %142 = vmatprep.subr.bf16.mxu0 0
    %143 = vmatpush1.bf16.msra.mxu0 %v119
    %144 = vmatprep.subr.bf16.mxu0 0
    %145 = vmatpush1.bf16.msra.mxu0 0
    %146 = vmatprep.subr.bf16.mxu0 0
    %147 = vmatpush1.bf16.msra.mxu0 0
    %148 = vmatprep.subr.bf16.mxu0 0
    %149 = vmatpush1.bf16.msra.mxu0 0
    %150 = vmatprep.subr.bf16.mxu0 0
    %151 = vmatpush1.bf16.msra.mxu0 0
    %152 = vmatprep.subr.bf16.mxu0 0
    %153 = vmatpush1.bf16.msra.mxu0 0
    %154 = vmatprep.subr.bf16.mxu0 0
    %155 = vmatpush1.bf16.msra.mxu0 0
    %156 = vmatprep.subr.bf16.mxu0 0
    %157 = vmatpush1.bf16.msra.mxu0 0
    %158 = vmatprep.subr.bf16.mxu0 0
    %159 = vmatpush1.bf16.msra.mxu0 0
    %160 = vmatprep.mubr.bf16.mxu0 0
    %161 = vmatmul.mubr.bf16.gmra.mrb[0].mxu0 %v78
    %v162 = vpop.f32.mrb[0].mxu0
    %v163 = vadd.f32 %v72, %v162
    %v164 = vpop.f32.mrb[0].mxu0
    %v165 = vpop.f32.mrb[0].mxu0
    %v166 = vadd.f32 %v72, %v165
    %v167 = vpop.f32.mrb[0].mxu0
    %168 = vdwg.mxu0
    %v169 = vmax.f32 %v163, 0.0
    %v170 = vmax.f32 %v166, 0.0
    %v171 = vpack.c.bf16 %v170, %v169
    %v172 = vld [vmem:[#allocation4] sm:$0xf]
    %v173 = vld [vmem:[#allocation4 + $0x4] sm:$0xf]
    %v174 = vld [vmem:[#allocation4 + $0x8] sm:$0xf]
    %v175 = vld [vmem:[#allocation4 + $0xc] sm:$0xf]
    %v176 = vld [vmem:[#allocation4 + $0x10] sm:$0xf]
    %v177 = vld [vmem:[#allocation4 + $0x14] sm:$0xf]
    %v178 = vld [vmem:[#allocation4 + $0x18] sm:$0xf]
    %v179 = vld [vmem:[#allocation4 + $0x1c] sm:$0xf]
    %v180 = vld [vmem:[#allocation4 + $0x20] sm:$0xf]
    %v181 = vld [vmem:[#allocation4 + $0x24] sm:$0xf]
    %v182 = vld [vmem:[#allocation4 + $0x28] sm:$0xf]
    %v183 = vld [vmem:[#allocation4 + $0x2c] sm:$0xf]
    %v184 = vld [vmem:[#allocation4 + $0x30] sm:$0xf]
    %v185 = vld [vmem:[#allocation4 + $0x34] sm:$0xf]
    %v186 = vld [vmem:[#allocation4 + $0x38] sm:$0xf]
    %v187 = vld [vmem:[#allocation4 + $0x3c] sm:$0xf]
    %v188 = vld [vmem:[%s4] sm:$0x1]
    %v190 = vlaneseq
    %v191 = vshrl.u32 %v190, 7
    %v192 = vsub.s32 0, %v191
    %v193 = vrot.slane %v188, %v192
    %v211 = vunpack.c.l.b16 %v172
    %v212 = vunpack.c.l.b16 %v173
    %v213 = vunpack.c.l.b16 %v174
    %v214 = vunpack.c.l.b16 %v175
    %v215 = vunpack.c.l.b16 %v176
    %v216 = vunpack.c.l.b16 %v177
    %v217 = vunpack.c.l.b16 %v178
    %v218 = vunpack.c.l.b16 %v179
    %v219 = vunpack.c.l.b16 %v180
    %v220 = vunpack.c.l.b16 %v181
    %v221 = vunpack.c.l.b16 %v182
    %v222 = vunpack.c.l.b16 %v183
    %v223 = vunpack.c.l.b16 %v184
    %v224 = vunpack.c.l.b16 %v185
    %v225 = vunpack.c.l.b16 %v186
    %v226 = vunpack.c.l.b16 %v187
    %v227 = vpack.c.b16 %v212, %v211
    %v228 = vpack.c.b16 %v214, %v213
    %v229 = vpack.c.b16 %v216, %v215
    %v230 = vpack.c.b16 %v218, %v217
    %v231 = vpack.c.b16 %v220, %v219
    %v232 = vpack.c.b16 %v222, %v221
    %v233 = vpack.c.b16 %v224, %v223
    %v234 = vpack.c.b16 %v226, %v225
    %243 = vmatprep.subr.bf16.mxu0 0
    %244 = vmatpush1.bf16.msra.mxu0 %v227
    %245 = vmatprep.subr.bf16.mxu0 0
    %246 = vmatpush1.bf16.msra.mxu0 %v228
    %247 = vmatprep.subr.bf16.mxu0 0
    %248 = vmatpush1.bf16.msra.mxu0 %v229
    %249 = vmatprep.subr.bf16.mxu0 0
    %250 = vmatpush1.bf16.msra.mxu0 %v230
    %251 = vmatprep.subr.bf16.mxu0 0
    %252 = vmatpush1.bf16.msra.mxu0 %v231
    %253 = vmatprep.subr.bf16.mxu0 0
    %254 = vmatpush1.bf16.msra.mxu0 %v232
    %255 = vmatprep.subr.bf16.mxu0 0
    %256 = vmatpush1.bf16.msra.mxu0 %v233
    %257 = vmatprep.subr.bf16.mxu0 0
    %258 = vmatpush1.bf16.msra.mxu0 %v234
    %259 = vmatprep.subr.bf16.mxu0 0
    %260 = vmatpush1.bf16.msra.mxu0 0
    %261 = vmatprep.subr.bf16.mxu0 0
    %262 = vmatpush1.bf16.msra.mxu0 0
    %263 = vmatprep.subr.bf16.mxu0 0
    %264 = vmatpush1.bf16.msra.mxu0 0
    %265 = vmatprep.subr.bf16.mxu0 0
    %266 = vmatpush1.bf16.msra.mxu0 0
    %267 = vmatprep.subr.bf16.mxu0 0
    %268 = vmatpush1.bf16.msra.mxu0 0
    %269 = vmatprep.subr.bf16.mxu0 0
    %270 = vmatpush1.bf16.msra.mxu0 0
    %271 = vmatprep.subr.bf16.mxu0 0
    %272 = vmatpush1.bf16.msra.mxu0 0
    %273 = vmatprep.subr.bf16.mxu0 0
    %274 = vmatpush1.bf16.msra.mxu0 0
    %275 = vmatprep.mubr.bf16.mxu0 0
    %276 = vmatmul.mubr.bf16.gmra.mrb[0].mxu0 %v171
    %v277 = vpop.f32.mrb[0].mxu0
    %v278 = vadd.f32 %v193, %v277
    %v279 = vpop.f32.mrb[0].mxu0
    %v280 = vpop.f32.mrb[0].mxu0
    %v281 = vadd.f32 %v193, %v280
    %v282 = vpop.f32.mrb[0].mxu0
    %283 = vdwg.mxu0
    %284 = vmax.xlane.f32.xlu0 %v278
    %v285 = vpop.xlane.xlu0 %284
    %286 = vmax.xlane.f32.xlu0 %v281
    %v287 = vpop.xlane.xlu0 %286
    %v288 = vsub.f32 %v278, %v285
    %v289 = vsub.f32 %v281, %v287
    %v290 = vmul.f32 %v288, 1.442695
    %v291 = vpow.pop %v290
    %v292 = vmul.f32 %v289, 1.442695
    %v293 = vpow.pop %v292
    %294 = vadd.xlane.f32.xlu0 %v291
    %v295 = vpop.xlane.xlu0 %294
    %296 = vadd.xlane.f32.xlu0 %v293
    %v297 = vpop.xlane.xlu0 %296
    %v298 = vrcp.pop %v295
    %v299 = vrcp.pop %v297
    %v300 = vmul.f32 %v291, %v298
    %v301 = vmul.f32 %v293, %v299
    %302 = vst [vmem:[%s5] sm:$0xff] %v300
    %303 = vst [vmem:[%s5 + $0x8] sm:$0xff] %v301
    // Predicated region
    $region30: #{_forward_impl.1} parent=1 // pred_check
      _
    $region31: #{_forward_impl.1} parent=1 // pred_check_branch
      %305 = sbr.rel (0) target = $region33
    $region32: #{_forward_impl.1} parent=1 // pred_region
      _
    $region33: #{_forward_impl.1} parent=1 // pred_fallthru
      _
    // Predicated region
    $region34: #{_forward_impl.1} parent=1 // pred_check
      _
    $region35: #{_forward_impl.1} parent=1 // pred_check_branch
      %307 = sbr.rel (0) target = $region37
    $region36: #{_forward_impl.1} parent=1 // pred_region
      _
    $region37: #{_forward_impl.1} parent=1 // pred_fallthru
      _
    %308 = vsyncpa [#allocation3], 1
    %309 = vsyncpa [#allocation5], 1

</llo_original>
